<compile_context>
chip_gen: v7x
topology: tpu7x:2x2x1
jax: 0.10.0
libtpu: 0.0.40
codegen_flags: <defaults>
</compile_context>

<pallas_src>
import functools

import jax
import jax.numpy as jnp
from jax.experimental import pallas as pl
from jax.experimental.pallas import tpu as pltpu

BN_EPS = 1e-5          # PyTorch BatchNorm2d default eps
LANE = 128             # TPU lane width; padding granularity
VMEM_LIMIT_BYTES = 32 * 1024 * 1024


def _round_up(x, m):
    return (x + m - 1) // m * m


def _pick_tile(dim, candidates=(512, 384, 256, 128)):
    # dim is always a multiple of 128 by construction; prefer big / 256-multiple tiles.
    for c in candidates:
        if dim % c == 0:
            return c
    return 128


def _compiler_params(sem):
    return pltpu.CompilerParams(dimension_semantics=sem,
                                vmem_limit_bytes=VMEM_LIMIT_BYTES)


# ---------------------------- Pallas kernels ----------------------------

def _bn_stats_kernel(x_ref, g_ref, b_ref, scale_ref, shift_ref,
                     sum_ref, sq_ref, *, count):
    """Single-pass per-channel batch stats -> (scale, shift) for BN+ReLU."""
    i = pl.program_id(0)

    @pl.when(i == 0)
    def _():
        sum_ref[...] = jnp.zeros_like(sum_ref)
        sq_ref[...] = jnp.zeros_like(sq_ref)

    x = x_ref[...]                                    # (tm, Cp) f32
    # Sublane-split partial sums: (tm, Cp) -> (tm//8, 8, Cp).  Reducing axis 0 is
    # pure per-vreg VPU adds; the cross-sublane reduce happens once in finalize.
    xg = x.reshape(x.shape[0] // 8, 8, x.shape[1])
    sum_ref[...] += jnp.sum(xg, axis=0)
    sq_ref[...] += jnp.sum(xg * xg, axis=0)

    @pl.when(i == pl.num_programs(0) - 1)
    def _():
        inv_count = 1.0 / count
        # TODO(synk): E[x^2]-E[x]^2 in f32 can cancel for large-mean channels;
        #             a shifted two-pass form would be safer for training parity.
        mean = jnp.sum(sum_ref[...], axis=0, keepdims=True) * inv_count
        ex2 = jnp.sum(sq_ref[...], axis=0, keepdims=True) * inv_count
        var = jnp.maximum(ex2 - mean * mean, 0.0)
        scale = g_ref[...] * jax.lax.rsqrt(var + BN_EPS)
        scale_ref[...] = scale
        shift_ref[...] = b_ref[...] - mean * scale


def _bn_apply_kernel(x_ref, scale_ref, shift_ref, o_ref):
    """y = relu(x * scale + shift), f32 math, bf16 output for the MXU."""
    y = x_ref[...] * scale_ref[...] + shift_ref[...]
    o_ref[...] = jnp.maximum(y, 0.0).astype(o_ref.dtype)


def _matmul_kernel(a_ref, w_ref, o_ref):
    """Tiled K-reduction matmul, accumulating directly into the resident f32 out block."""
    @pl.when(pl.program_id(2) == 0)
    def _():
        o_ref[...] = jnp.zeros_like(o_ref)

    o_ref[...] += jnp.dot(a_ref[...], w_ref[...],
                          preferred_element_type=jnp.float32)


def _matmul_residual_kernel(a_ref, w_ref, r_ref, o_ref):
    """Same as above with the residual add fused into the last-K step."""
    @pl.when(pl.program_id(2) == 0)
    def _():
        o_ref[...] = jnp.zeros_like(o_ref)

    o_ref[...] += jnp.dot(a_ref[...], w_ref[...],
                          preferred_element_type=jnp.float32)

    @pl.when(pl.program_id(2) == pl.num_programs(2) - 1)
    def _():
        o_ref[...] += r_ref[...]


# ---------------------------- kernel wrappers ----------------------------

def bn_relu(x, gamma, beta):
    """Training-mode BN (batch stats) + ReLU.

    x: (N, H, W, Cp) f32, channel-padded (lane-dense).  gamma/beta: (1, Cp) f32,
    zero-padded channels (=> padded channels stay exactly zero after ReLU).
    Returns bf16 activation of the same shape.
    """
    N, H, W, Cp = x.shape
    M = N * H * W
    x2 = x.reshape(M, Cp)
    Mp = _round_up(M, LANE)
    if Mp != M:
        x2 = jnp.pad(x2, ((0, Mp - M), (0, 0)))   # zero rows: no effect on sums
    tm = _pick_tile(Mp, (1024, 512, 256, 128))
    grid = (Mp // tm,)

    # Pass 1: per-channel scale/shift from single-pass sum / sum-of-squares.
    scale, shift = pl.pallas_call(
        functools.partial(_bn_stats_kernel, count=float(M)),
        out_shape=(jax.ShapeDtypeStruct((1, Cp), jnp.float32),
                   jax.ShapeDtypeStruct((1, Cp), jnp.float32)),
        grid=grid,
        in_specs=[pl.BlockSpec((tm, Cp), lambda i: (i, 0)),
                  pl.BlockSpec((1, Cp), lambda i: (0, 0)),
                  pl.BlockSpec((1, Cp), lambda i: (0, 0))],
        out_specs=(pl.BlockSpec((1, Cp), lambda i: (0, 0)),
                   pl.BlockSpec((1, Cp), lambda i: (0, 0))),
        scratch_shapes=[pltpu.VMEM((8, Cp), jnp.float32),
                        pltpu.VMEM((8, Cp), jnp.float32)],
        compiler_params=_compiler_params(("arbitrary",)),
    )(x2, gamma, beta)

    # Pass 2: apply scale/shift + ReLU, emit bf16 for the MXU.
    # NOTE: padded M rows produce relu(shift) and are trimmed by act[:M] below.
    act = pl.pallas_call(
        _bn_apply_kernel,
        out_shape=jax.ShapeDtypeStruct((Mp, Cp), jnp.bfloat16),
        grid=grid,
        in_specs=[pl.BlockSpec((tm, Cp), lambda i: (i, 0)),
                  pl.BlockSpec((1, Cp), lambda i: (0, 0)),
                  pl.BlockSpec((1, Cp), lambda i: (0, 0))],
        out_specs=pl.BlockSpec((tm, Cp), lambda i: (i, 0)),
        compiler_params=_compiler_params(("parallel",)),
    )(x2, scale, shift)

    return act[:M].reshape(N, H, W, Cp)


def matmul_tiled(a, w, residual=None):
    """out = a @ w (+ residual), tiled/pipelined on the MXU.

    a: (M, K) bf16;  w: (K, Coutp) bf16;  residual: (M, Coutp) f32 or None.
    M, K, Coutp are multiples of 128.  Output is f32 (accumulated in-place in
    the resident output block; no extra VMEM scratch).
    """
    M, K = a.shape
    _, N = w.shape
    tm, tn, tk = _pick_tile(M), _pick_tile(N), _pick_tile(K)
    # v7x has 2 TensorCores sharded across the "parallel" grid dims: keep at
    # least 2 parallel steps when the problem allows it (no effect on v5e/v6e
    # beyond one extra ~0.35us grid step).
    if (M // tm) * (N // tn) < 2:
        for c in (256, 128):
            if c < tm and M % c == 0:
                tm = c
                break
    grid = (M // tm, N // tn, K // tk)

    bytes_accessed = (a.size * a.dtype.itemsize + w.size * w.dtype.itemsize
                      + M * N * 4)
    if residual is not None:
        bytes_accessed += M * N * 4
    cost = pl.CostEstimate(flops=2 * M * K * N, transcendentals=0,
                           bytes_accessed=bytes_accessed)

    in_specs = [pl.BlockSpec((tm, tk), lambda i, j, k: (i, k)),
                pl.BlockSpec((tk, tn), lambda i, j, k: (k, j))]
    if residual is None:
        kernel, args = _matmul_kernel, (a, w)
    else:
        in_specs.append(pl.BlockSpec((tm, tn), lambda i, j, k: (i, j)))
        kernel, args = _matmul_residual_kernel, (a, w, residual)

    return pl.pallas_call(
        kernel,
        out_shape=jax.ShapeDtypeStruct((M, N), jnp.float32),
        grid=grid,
        in_specs=in_specs,
        out_specs=pl.BlockSpec((tm, tn), lambda i, j, k: (i, j)),
        compiler_params=_compiler_params(("parallel", "parallel", "arbitrary")),
        cost_estimate=cost,
    )(*args)


def conv2d(x, w_hwio, stride, residual=None):
    """Conv2d (no bias, spatial padding already applied) via im2col + MXU matmul.

    x:       (N, Hp, Wp, Cin)  NHWC bf16 with the TRUE channel count (no channel
             padding before patch extraction), spatially pre-padded.
    w_hwio:  (KH, KW, Cin, Coutp) bf16; only Cout is lane-padded.
    residual (optional): (N, Ho, Wo, Coutp) f32, fused into the kernel finalize.

    The reduction dim K = KH*KW*Cin is padded to a 128 multiple (instead of
    padding Cin to 128 first), avoiding KH*KW x amplification of zero padding.
    """
    N, Hp, Wp, Cin = x.shape
    KH, KW, _, Coutp = w_hwio.shape
    Ho = (Hp - KH) // stride + 1
    Wo = (Wp - KW) // stride + 1
    M = N * Ho * Wo
    K = KH * KW * Cin
    Kp = _round_up(K, LANE)

    if KH == 1 and KW == 1 and stride == 1:
        a = x.reshape(M, K)
    else:
        # TODO(synk): im2col is materialized in HBM by plain-JAX glue; an
        #             implicit-GEMM A-tile DMA would remove this traffic.
        cols = []
        for i in range(KH):
            for j in range(KW):
                cols.append(x[:, i:i + stride * (Ho - 1) + 1:stride,
                              j:j + stride * (Wo - 1) + 1:stride, :])
        a = jnp.concatenate(cols, axis=-1).reshape(M, K)
    wf = w_hwio.reshape(K, Coutp)

    Mp = _round_up(M, LANE)
    if Kp != K:
        a = jnp.pad(a, ((0, 0), (0, Kp - K)))
        wf = jnp.pad(wf, ((0, Kp - K), (0, 0)))
    if Mp != M:
        a = jnp.pad(a, ((0, Mp - M), (0, 0)))

    r2 = None
    if residual is not None:
        r2 = residual.reshape(M, Coutp).astype(jnp.float32)
        if Mp != M:
            r2 = jnp.pad(r2, ((0, Mp - M), (0, 0)))

    out = matmul_tiled(a, wf, r2)
    return out[:M].reshape(N, Ho, Wo, Coutp)


# ---------------------------- _Block / _BlockGroup ----------------------------

def block_forward(x, p):
    """One WideResNet _Block. x: (N, H, W, Cinp) f32 NHWC, channel-padded."""
    has_shortcut = p["shortcut_w"] is not None
    stride = p["stride"]
    cin = p["in_planes"]
    cout = p["out_planes"]
    x_in = x

    act = bn_relu(x, p["bn0_gamma"], p["bn0_beta"])     # relu(bn0(x)), bf16, padded C
    act_t = act[..., :cin]                              # true channels for the convs

    # F.pad semantics of the reference: stride 1 -> (1,1,1,1); stride 2 -> (0,1,0,1).
    if stride == 1:
        v = jnp.pad(act_t, ((0, 0), (1, 1), (1, 1), (0, 0)))
    elif stride == 2:
        v = jnp.pad(act_t, ((0, 0), (0, 1), (0, 1), (0, 0)))
    else:
        raise ValueError("Unsupported `stride`.")

    out = conv2d(v, p["conv0_w"], stride)               # (N,Ho,Wo,Coutp) f32
    act1 = bn_relu(out, p["bn1_gamma"], p["bn1_beta"])  # bf16, padded C
    act1_t = act1[..., :cout]

    if has_shortcut:
        # 1x1 conv, stride s, padding 0, applied to relu(bn0(x)).
        xs = act_t[:, ::stride, ::stride, :]
        res = conv2d(xs, p["shortcut_w"], 1)            # (N,Ho,Wo,Coutp) f32
    else:
        res = x_in   # identity shortcut uses the ORIGINAL block input (f32, padded C)

    # conv_1: 3x3, stride 1, padding 1, residual add fused into the matmul finalize.
    out = conv2d(jnp.pad(act1_t, ((0, 0), (1, 1), (1, 1), (0, 0))),
                 p["conv1_w"], 1, residual=res)
    return out


def block_group_forward(x_nchw, params):
    x = jnp.transpose(x_nchw, (0, 2, 3, 1)).astype(jnp.float32)  # NCHW -> NHWC
    cin = x.shape[-1]
    cinp = _round_up(cin, LANE)
    if cinp != cin:
        x = jnp.pad(x, ((0, 0), (0, 0), (0, 0), (0, cinp - cin)))
    for p in params:
        x = block_forward(x, p)
    x = x[..., :params[-1]["out_planes"]]                         # drop channel pad
    return jnp.transpose(x, (0, 3, 1, 2))                         # NHWC -> NCHW


# ---------------------------- deterministic parameter init ----------------------------

def _oihw_to_hwio(w):
    return jnp.transpose(w, (2, 3, 1, 0))


def _pad_vec(v, cp):
    # gamma/beta padded with ZEROS: padded channels get scale=0, shift=0 -> stay 0.
    return jnp.pad(v, (0, cp - v.shape[0])).reshape(1, cp)


def _pad_cout(w_hwio, coutp):
    # Pad ONLY the output-channel dim; Cin stays at its true size (K is padded at
    # the matmul boundary instead).
    kh, kw, ci, co = w_hwio.shape
    w = jnp.pad(w_hwio, ((0, 0), (0, 0), (0, 0), (0, coutp - co)))
    return w.astype(jnp.bfloat16)


def init_block_params(key, in_p, out_p, stride):
    ks = jax.random.split(key, 7)
    cinp, coutp = _round_up(in_p, LANE), _round_up(out_p, LANE)
    conv0 = _oihw_to_hwio(0.1 * jax.random.normal(ks[4], (out_p, in_p, 3, 3), jnp.float32))
    conv1 = _oihw_to_hwio(0.1 * jax.random.normal(ks[5], (out_p, out_p, 3, 3), jnp.float32))
    shortcut = None
    if in_p != out_p:
        shortcut = _pad_cout(
            _oihw_to_hwio(0.1 * jax.random.normal(ks[6], (out_p, in_p, 1, 1), jnp.float32)),
            coutp)
    return {
        "stride": stride,
        "in_planes": in_p,
        "out_planes": out_p,
        "bn0_gamma": _pad_vec(1.0 + 0.1 * jax.random.normal(ks[0], (in_p,), jnp.float32), cinp),
        "bn0_beta": _pad_vec(0.1 * jax.random.normal(ks[1], (in_p,), jnp.float32), cinp),
        "bn1_gamma": _pad_vec(1.0 + 0.1 * jax.random.normal(ks[2], (out_p,), jnp.float32), coutp),
        "bn1_beta": _pad_vec(0.1 * jax.random.normal(ks[3], (out_p,), jnp.float32), coutp),
        "conv0_w": _pad_cout(conv0, coutp),
        "conv1_w": _pad_cout(conv1, coutp),
        "shortcut_w": shortcut,
    }


def init_block_group_params(key, num_blocks, in_planes, out_planes, stride):
    keys = jax.random.split(key, num_blocks)
    return [
        init_block_params(keys[i],
                          in_planes if i == 0 else out_planes,
                          out_planes,
                          stride if i == 0 else 1)
        for i in range(num_blocks)
    ]


if __name__ == "__main__":
    key = jax.random.PRNGKey(0)
    kx, kp = jax.random.split(key)

    # _BlockGroup(num_blocks=2, in_planes=4, out_planes=8, stride=2)
    x = jax.random.normal(kx, (2, 4, 16, 16), jnp.float32)  # NCHW input
    params = init_block_group_params(kp, num_blocks=2,
                                     in_planes=4, out_planes=8, stride=2)

    out = block_group_forward(x, params)
    out = jax.block_until_ready(out)
    assert out.shape == (2, 8, 8, 8), out.shape
    assert jnp.all(jnp.isfinite(out))
    print("KERNEL_OK")
</pallas_src>

<mosaic_0001>
module attributes {stable_mosaic.version = 11 : i64} {
  func.func @_bn_stats_kernel(%arg0: i32, %arg1: memref<512x128xf32, #tpu.memory_space<vmem>>, %arg2: memref<1x128xf32, #tpu.memory_space<vmem>>, %arg3: memref<1x128xf32, #tpu.memory_space<vmem>>, %arg4: memref<1x128xf32, #tpu.memory_space<vmem>>, %arg5: memref<1x128xf32, #tpu.memory_space<vmem>>, %arg6: memref<8x128xf32, #tpu.memory_space<vmem>>, %arg7: memref<8x128xf32, #tpu.memory_space<vmem>>) attributes {dimension_semantics = [#tpu.dimension_semantics<arbitrary>], iteration_bounds = array<i64: 1>, scalar_prefetch = 0 : i64, scratch_operands = 2 : i64, tpu.core_type = #tpu.core_type<tc>, window_params = [{transform_indices = @transform_0, window_bounds = array<i64: 512, 128>}, {pipeline_mode = #tpu.pipeline_mode<synchronous>, transform_indices = @transform_1, window_bounds = array<i64: 1, 128>}, {pipeline_mode = #tpu.pipeline_mode<synchronous>, transform_indices = @transform_2, window_bounds = array<i64: 1, 128>}, {pipeline_mode = #tpu.pipeline_mode<synchronous>, transform_indices = @transform_3, window_bounds = array<i64: 1, 128>}, {pipeline_mode = #tpu.pipeline_mode<synchronous>, transform_indices = @transform_4, window_bounds = array<i64: 1, 128>}]} {
    %c0_i32 = arith.constant 0 : i32
    %0 = arith.cmpi eq, %arg0, %c0_i32 : i32
    %1 = arith.extui %0 : i1 to i32
    %c0_i32_0 = arith.constant 0 : i32
    %2 = arith.cmpi ne, %1, %c0_i32_0 : i32
    scf.if %2 {
      %cst_13 = arith.constant 0.000000e+00 : f32
      %17 = vector.broadcast %cst_13 : f32 to vector<8x128xf32>
      %c0_14 = arith.constant 0 : index
      %c0_15 = arith.constant 0 : index
      %18 = vector.load %arg6[%c0_14, %c0_15] : memref<8x128xf32, #tpu.memory_space<vmem>>, vector<8x128xf32>
      tpu.vector_store %arg6[%c0_14, %c0_15], %17 {strides = array<i32>} : memref<8x128xf32, #tpu.memory_space<vmem>>, vector<8x128xf32>,
      %cst_16 = arith.constant 0.000000e+00 : f32
      %19 = vector.broadcast %cst_16 : f32 to vector<8x128xf32>
      %c0_17 = arith.constant 0 : index
      %c0_18 = arith.constant 0 : index
      %20 = vector.load %arg7[%c0_17, %c0_18] : memref<8x128xf32, #tpu.memory_space<vmem>>, vector<8x128xf32>
      tpu.vector_store %arg7[%c0_17, %c0_18], %19 {strides = array<i32>} : memref<8x128xf32, #tpu.memory_space<vmem>>, vector<8x128xf32>,
    } else {
    }
    %c0 = arith.constant 0 : index
    %c0_1 = arith.constant 0 : index
    %3 = vector.load %arg1[%c0, %c0_1] : memref<512x128xf32, #tpu.memory_space<vmem>>, vector<512x128xf32>
    %4 = vector.shape_cast %3 : vector<512x128xf32> to vector<64x8x128xf32>
    %c0_2 = arith.constant 0 : index
    %c0_3 = arith.constant 0 : index
    %5 = vector.load %arg6[%c0_2, %c0_3] : memref<8x128xf32, #tpu.memory_space<vmem>>, vector<8x128xf32>
    %cst = arith.constant dense<0.000000e+00> : vector<8x128xf32>
    %6 = vector.multi_reduction <add>, %4, %cst [0] : vector<64x8x128xf32> to vector<8x128xf32>
    %7 = arith.addf %5, %6 : vector<8x128xf32>
    %c0_4 = arith.constant 0 : index
    %c0_5 = arith.constant 0 : index
    %8 = vector.load %arg6[%c0_4, %c0_5] : memref<8x128xf32, #tpu.memory_space<vmem>>, vector<8x128xf32>
    tpu.vector_store %arg6[%c0_4, %c0_5], %7 {strides = array<i32>} : memref<8x128xf32, #tpu.memory_space<vmem>>, vector<8x128xf32>,
    %c0_6 = arith.constant 0 : index
    %c0_7 = arith.constant 0 : index
    %9 = vector.load %arg7[%c0_6, %c0_7] : memref<8x128xf32, #tpu.memory_space<vmem>>, vector<8x128xf32>
    %10 = arith.mulf %4, %4 : vector<64x8x128xf32>
    %cst_8 = arith.constant dense<0.000000e+00> : vector<8x128xf32>
    %11 = vector.multi_reduction <add>, %10, %cst_8 [0] : vector<64x8x128xf32> to vector<8x128xf32>
    %12 = arith.addf %9, %11 : vector<8x128xf32>
    %c0_9 = arith.constant 0 : index
    %c0_10 = arith.constant 0 : index
    %13 = vector.load %arg7[%c0_9, %c0_10] : memref<8x128xf32, #tpu.memory_space<vmem>>, vector<8x128xf32>
    tpu.vector_store %arg7[%c0_9, %c0_10], %12 {strides = array<i32>} : memref<8x128xf32, #tpu.memory_space<vmem>>, vector<8x128xf32>,
    %c0_i32_11 = arith.constant 0 : i32
    %14 = arith.cmpi eq, %arg0, %c0_i32_11 : i32
    %15 = arith.extui %14 : i1 to i32
    %c0_i32_12 = arith.constant 0 : i32
    %16 = arith.cmpi ne, %15, %c0_i32_12 : i32
    scf.if %16 {
      %c0_13 = arith.constant 0 : index
      %c0_14 = arith.constant 0 : index
      %17 = vector.load %arg6[%c0_13, %c0_14] : memref<8x128xf32, #tpu.memory_space<vmem>>, vector<8x128xf32>
      %cst_15 = arith.constant dense<0.000000e+00> : vector<128xf32>
      %18 = vector.multi_reduction <add>, %17, %cst_15 [0] : vector<8x128xf32> to vector<128xf32>
      %19 = vector.shape_cast %18 : vector<128xf32> to vector<1x128xf32>
      %cst_16 = arith.constant 0.001953125 : f32
      %20 = vector.broadcast %cst_16 : f32 to vector<1x128xf32>
      %21 = arith.mulf %19, %20 : vector<1x128xf32>
      %c0_17 = arith.constant 0 : index
      %c0_18 = arith.constant 0 : index
      %22 = vector.load %arg7[%c0_17, %c0_18] : memref<8x128xf32, #tpu.memory_space<vmem>>, vector<8x128xf32>
      %cst_19 = arith.constant dense<0.000000e+00> : vector<128xf32>
      %23 = vector.multi_reduction <add>, %22, %cst_19 [0] : vector<8x128xf32> to vector<128xf32>
      %24 = vector.shape_cast %23 : vector<128xf32> to vector<1x128xf32>
      %cst_20 = arith.constant 0.001953125 : f32
      %25 = vector.broadcast %cst_20 : f32 to vector<1x128xf32>
      %26 = arith.mulf %24, %25 : vector<1x128xf32>
      %27 = arith.mulf %21, %21 : vector<1x128xf32>
      %28 = arith.subf %26, %27 : vector<1x128xf32>
      %cst_21 = arith.constant 0.000000e+00 : f32
      %29 = vector.broadcast %cst_21 : f32 to vector<1x128xf32>
      %30 = arith.maximumf %28, %29 : vector<1x128xf32>
      %c0_22 = arith.constant 0 : index
      %c0_23 = arith.constant 0 : index
      %31 = vector.load %arg2[%c0_22, %c0_23] : memref<1x128xf32, #tpu.memory_space<vmem>>, vector<1x128xf32>
      %cst_24 = arith.constant 9.99999974E-6 : f32
      %32 = vector.broadcast %cst_24 : f32 to vector<1x128xf32>
      %33 = arith.addf %30, %32 : vector<1x128xf32>
      %34 = math.rsqrt %33 : vector<1x128xf32>
      %35 = arith.mulf %31, %34 : vector<1x128xf32>
      %c0_25 = arith.constant 0 : index
      %c0_26 = arith.constant 0 : index
      %36 = vector.load %arg4[%c0_25, %c0_26] : memref<1x128xf32, #tpu.memory_space<vmem>>, vector<1x128xf32>
      tpu.vector_store %arg4[%c0_25, %c0_26], %35 {strides = array<i32>} : memref<1x128xf32, #tpu.memory_space<vmem>>, vector<1x128xf32>,
      %c0_27 = arith.constant 0 : index
      %c0_28 = arith.constant 0 : index
      %37 = vector.load %arg3[%c0_27, %c0_28] : memref<1x128xf32, #tpu.memory_space<vmem>>, vector<1x128xf32>
      %38 = arith.mulf %21, %35 : vector<1x128xf32>
      %39 = arith.subf %37, %38 : vector<1x128xf32>
      %c0_29 = arith.constant 0 : index
      %c0_30 = arith.constant 0 : index
      %40 = vector.load %arg5[%c0_29, %c0_30] : memref<1x128xf32, #tpu.memory_space<vmem>>, vector<1x128xf32>
      tpu.vector_store %arg5[%c0_29, %c0_30], %39 {strides = array<i32>} : memref<1x128xf32, #tpu.memory_space<vmem>>, vector<1x128xf32>,
    } else {
    }
    return
  }
  func.func @transform_0(%arg0: i32) -> (i32, i32) {
    %c0_i32 = arith.constant 0 : i32
    %c0_i32_0 = arith.constant 0 : i32
    return %arg0, %c0_i32 : i32, i32
  }
  func.func @transform_1(%arg0: i32) -> (i32, i32) {
    %c0_i32 = arith.constant 0 : i32
    %c0_i32_0 = arith.constant 0 : i32
    %c0_i32_1 = arith.constant 0 : i32
    return %c0_i32, %c0_i32_0 : i32, i32
  }
  func.func @transform_2(%arg0: i32) -> (i32, i32) {
    %c0_i32 = arith.constant 0 : i32
    %c0_i32_0 = arith.constant 0 : i32
    %c0_i32_1 = arith.constant 0 : i32
    return %c0_i32, %c0_i32_0 : i32, i32
  }
  func.func @transform_3(%arg0: i32) -> (i32, i32) {
    %c0_i32 = arith.constant 0 : i32
    %c0_i32_0 = arith.constant 0 : i32
    %c0_i32_1 = arith.constant 0 : i32
    return %c0_i32, %c0_i32_0 : i32, i32
  }
  func.func @transform_4(%arg0: i32) -> (i32, i32) {
    %c0_i32 = arith.constant 0 : i32
    %c0_i32_0 = arith.constant 0 : i32
    %c0_i32_1 = arith.constant 0 : i32
    return %c0_i32, %c0_i32_0 : i32, i32
  }
}

</mosaic_0001>

<llo_original>
// kernel: tpu_custom_call.1
$region0: #{tpu_custom_call.1}
  #allocation0 [shape = 'u32[]', space=smem, size = 0x4, offset = 0x4, fixed_abs, tag = 'smem constant byte address 0x4 - core index']
  #allocation1 [shape = 'u32[144,128]{1,0:T(1,128)}', space=vmem, size = 0x12000, scoped, tag = 'internal scratch']
  #allocation2 [shape = 'f32[8,128]{1,0:T(8,128)}', space=vmem, size = 0x1000, scoped, tag = 'scratch operand']
  #allocation3 [shape = 'f32[8,128]{1,0:T(8,128)}', space=vmem, size = 0x1000, scoped, tag = 'scratch operand']
  %s0 = inlined_call_operand.hbm [shape: f32[512,128], index: 0, kind: input, shape index: {}]
  %s1 = inlined_call_operand.vmem [shape: f32[1,128], index: 1, kind: input, shape index: {}]
  %s2 = inlined_call_operand.vmem [shape: f32[1,128], index: 2, kind: input, shape index: {}]
  %s3 = inlined_call_operand.hbm [shape: f32[1,128], index: 3, kind: output, shape index: {0}]
  %s4 = inlined_call_operand.hbm [shape: f32[1,128], index: 4, kind: output, shape index: {1}]
  %5 = xla_tuple %s3, %s4
  %s6 = sld [smem:[#allocation0]]
  $region42: #{tpu_custom_call.1} parent=0
    _
  %s8 = ssub.s32 1, %s6
  %s9 = scalar_select 0, %s8, %s6
  $region1: #{tpu_custom_call.1} parent=0
    #allocation4 [shape = 'u8[262144]{0}', space=vmem, size = 0x40000, scoped, tag = 'input window, operand 0, single buffered']
    #allocation5 [shape = 's32[1]{0}', space=sflag, size = 0x4, scoped, tag = 'scoped memory for tpu_custom_call.1']
    #allocation6 [shape = 's32[1]{0}', space=sflag, size = 0x4, scoped, tag = 'scoped memory for tpu_custom_call.1']
    #allocation7 [shape = 'u8[512]{0}', space=vmem, size = 0x400, scoped, tag = 'output window, operand 0, single buffered']
    #allocation8 [shape = 'u8[512]{0}', space=vmem, size = 0x400, scoped, tag = 'output window, operand 1, single buffered']
    #allocation9 [shape = 's32[1]{0}', space=sflag, size = 0x4, scoped, tag = 'scoped memory for tpu_custom_call.1']
    %10 = vsyncpa [#allocation5], 0
    %11 = vsyncpa [#allocation6], 0
    %12 = vsyncpa [#allocation9], 0
    // Predicated region
    $region2: #{tpu_custom_call.1} parent=1 // pred_check
      _
    $region3: #{tpu_custom_call.1} parent=1 // pred_check_branch
      %14 = sbr.rel (0) target = $region5
    $region4: #{tpu_custom_call.1} parent=1 // pred_region
      %s16 = ssub.s32 8192, 8192
      %17 = vsyncadd [#allocation5], %s16
      %s18 = sshll.u32 [#allocation4], 4
      %s19 = int_to_ptr.vmem [resolvable:$true] %s18
      %24 = dma.hbm_to_vmem [thread:$0]  %s0, 8192, %s19, [#allocation5], 128, 128, 8
    $region5: #{tpu_custom_call.1} parent=1 // pred_fallthru
      _
    // Predicated region
    $region6: #{tpu_custom_call.1} parent=1 // pred_check
      _
    $region7: #{tpu_custom_call.1} parent=1 // pred_check_branch
      %26 = sbr.rel (0) target = $region9
    $region8: #{tpu_custom_call.1} parent=1 // pred_region
      _
    $region9: #{tpu_custom_call.1} parent=1 // pred_fallthru
      _
    // Predicated region
    $region10: #{tpu_custom_call.1} parent=1 // pred_check
      _
    $region11: #{tpu_custom_call.1} parent=1 // pred_check_branch
      %28 = sbr.rel (0) target = $region13
    $region12: #{tpu_custom_call.1} parent=1 // pred_region
      _
    $region13: #{tpu_custom_call.1} parent=1 // pred_fallthru
      _
    // Predicated region
    $region14: #{tpu_custom_call.1} parent=1 // pred_check
      _
    $region15: #{tpu_custom_call.1} parent=1 // pred_check_branch
      %30 = sbr.rel (0) target = $region17
    $region16: #{tpu_custom_call.1} parent=1 // pred_region
      %31 = dma.done [#allocation5], 8192
    $region17: #{tpu_custom_call.1} parent=1 // pred_fallthru
      _
    %p32 = scmp.eq.s32.totalorder 0, 0
    // Predicated region
    $region18: #{tpu_custom_call.1} parent=1 // pred_check
      %p33 = pneg %p32
    $region19: #{tpu_custom_call.1} parent=1 // pred_check_branch
      %35 = sbr.rel (%p33) target = $region21
    $region20: #{tpu_custom_call.1} parent=1 // pred_region
      %36 = vst [vmem:[#allocation2] sm:$0xff] 0.0
      %37 = vst [vmem:[#allocation3] sm:$0xff] 0.0
    $region21: #{tpu_custom_call.1} parent=1 // pred_fallthru
      _
    %v38 = vld [vmem:[#allocation4] sm:$0xff]
    %v39 = vld [vmem:[#allocation4 + $0x8] sm:$0xff]
    %v40 = vld [vmem:[#allocation4 + $0x10] sm:$0xff]
    %v41 = vld [vmem:[#allocation4 + $0x18] sm:$0xff]
    %v42 = vld [vmem:[#allocation4 + $0x20] sm:$0xff]
    %v43 = vld [vmem:[#allocation4 + $0x28] sm:$0xff]
    %v44 = vld [vmem:[#allocation4 + $0x30] sm:$0xff]
    %v45 = vld [vmem:[#allocation4 + $0x38] sm:$0xff]
    %v46 = vld [vmem:[#allocation4 + $0x40] sm:$0xff]
    %v47 = vld [vmem:[#allocation4 + $0x48] sm:$0xff]
    %v48 = vld [vmem:[#allocation4 + $0x50] sm:$0xff]
    %v49 = vld [vmem:[#allocation4 + $0x58] sm:$0xff]
    %v50 = vld [vmem:[#allocation4 + $0x60] sm:$0xff]
    %v51 = vld [vmem:[#allocation4 + $0x68] sm:$0xff]
    %v52 = vld [vmem:[#allocation4 + $0x70] sm:$0xff]
    %v53 = vld [vmem:[#allocation4 + $0x78] sm:$0xff]
    %v54 = vld [vmem:[#allocation4 + $0x80] sm:$0xff]
    %v55 = vld [vmem:[#allocation4 + $0x88] sm:$0xff]
    %v56 = vld [vmem:[#allocation4 + $0x90] sm:$0xff]
    %v57 = vld [vmem:[#allocation4 + $0x98] sm:$0xff]
    %v58 = vld [vmem:[#allocation4 + $0xa0] sm:$0xff]
    %v59 = vld [vmem:[#allocation4 + $0xa8] sm:$0xff]
    %v60 = vld [vmem:[#allocation4 + $0xb0] sm:$0xff]
    %v61 = vld [vmem:[#allocation4 + $0xb8] sm:$0xff]
    %v62 = vld [vmem:[#allocation4 + $0xc0] sm:$0xff]
    %v63 = vld [vmem:[#allocation4 + $0xc8] sm:$0xff]
    %v64 = vld [vmem:[#allocation4 + $0xd0] sm:$0xff]
    %v65 = vld [vmem:[#allocation4 + $0xd8] sm:$0xff]
    %v66 = vld [vmem:[#allocation4 + $0xe0] sm:$0xff]
    %v67 = vld [vmem:[#allocation4 + $0xe8] sm:$0xff]
    %v68 = vld [vmem:[#allocation4 + $0xf0] sm:$0xff]
    %v69 = vld [vmem:[#allocation4 + $0xf8] sm:$0xff]
    %v70 = vld [vmem:[#allocation4 + $0x100] sm:$0xff]
    %v71 = vld [vmem:[#allocation4 + $0x108] sm:$0xff]
    %v72 = vld [vmem:[#allocation4 + $0x110] sm:$0xff]
    %v73 = vld [vmem:[#allocation4 + $0x118] sm:$0xff]
    %v74 = vld [vmem:[#allocation4 + $0x120] sm:$0xff]
    %v75 = vld [vmem:[#allocation4 + $0x128] sm:$0xff]
    %v76 = vld [vmem:[#allocation4 + $0x130] sm:$0xff]
    %v77 = vld [vmem:[#allocation4 + $0x138] sm:$0xff]
    %v78 = vld [vmem:[#allocation4 + $0x140] sm:$0xff]
    %v79 = vld [vmem:[#allocation4 + $0x148] sm:$0xff]
    %v80 = vld [vmem:[#allocation4 + $0x150] sm:$0xff]
    %v81 = vld [vmem:[#allocation4 + $0x158] sm:$0xff]
    %v82 = vld [vmem:[#allocation4 + $0x160] sm:$0xff]
    %v83 = vld [vmem:[#allocation4 + $0x168] sm:$0xff]
    %v84 = vld [vmem:[#allocation4 + $0x170] sm:$0xff]
    %v85 = vld [vmem:[#allocation4 + $0x178] sm:$0xff]
    %v86 = vld [vmem:[#allocation4 + $0x180] sm:$0xff]
    %v87 = vld [vmem:[#allocation4 + $0x188] sm:$0xff]
    %v88 = vld [vmem:[#allocation4 + $0x190] sm:$0xff]
    %v89 = vld [vmem:[#allocation4 + $0x198] sm:$0xff]
    %v90 = vld [vmem:[#allocation4 + $0x1a0] sm:$0xff]
    %v91 = vld [vmem:[#allocation4 + $0x1a8] sm:$0xff]
    %v92 = vld [vmem:[#allocation4 + $0x1b0] sm:$0xff]
    %v93 = vld [vmem:[#allocation4 + $0x1b8] sm:$0xff]
    %v94 = vld [vmem:[#allocation4 + $0x1c0] sm:$0xff]
    %v95 = vld [vmem:[#allocation4 + $0x1c8] sm:$0xff]
    %v96 = vld [vmem:[#allocation4 + $0x1d0] sm:$0xff]
    %v97 = vld [vmem:[#allocation4 + $0x1d8] sm:$0xff]
    %v98 = vld [vmem:[#allocation4 + $0x1e0] sm:$0xff]
    %v99 = vld [vmem:[#allocation4 + $0x1e8] sm:$0xff]
    %v100 = vld [vmem:[#allocation4 + $0x1f0] sm:$0xff]
    %v101 = vld [vmem:[#allocation4 + $0x1f8] sm:$0xff]
    %v102 = vld [vmem:[#allocation2] sm:$0xff]
    %v103 = vadd.f32 %v38, %v39
    %v104 = vadd.f32 %v103, %v40
    %v105 = vadd.f32 %v104, %v41
    %v106 = vadd.f32 %v105, %v42
    %v107 = vadd.f32 %v106, %v43
    %v108 = vadd.f32 %v107, %v44
    %v109 = vadd.f32 %v108, %v45
    %v110 = vadd.f32 %v109, %v46
    %v111 = vadd.f32 %v110, %v47
    %v112 = vadd.f32 %v111, %v48
    %v113 = vadd.f32 %v112, %v49
    %v114 = vadd.f32 %v113, %v50
    %v115 = vadd.f32 %v114, %v51
    %v116 = vadd.f32 %v115, %v52
    %v117 = vadd.f32 %v116, %v53
    %v118 = vadd.f32 %v117, %v54
    %v119 = vadd.f32 %v118, %v55
    %v120 = vadd.f32 %v119, %v56
    %v121 = vadd.f32 %v120, %v57
    %v122 = vadd.f32 %v121, %v58
    %v123 = vadd.f32 %v122, %v59
    %v124 = vadd.f32 %v123, %v60
    %v125 = vadd.f32 %v124, %v61
    %v126 = vadd.f32 %v125, %v62
    %v127 = vadd.f32 %v126, %v63
    %v128 = vadd.f32 %v127, %v64
    %v129 = vadd.f32 %v128, %v65
    %v130 = vadd.f32 %v129, %v66
    %v131 = vadd.f32 %v130, %v67
    %v132 = vadd.f32 %v131, %v68
    %v133 = vadd.f32 %v132, %v69
    %v134 = vadd.f32 %v133, %v70
    %v135 = vadd.f32 %v134, %v71
    %v136 = vadd.f32 %v135, %v72
    %v137 = vadd.f32 %v136, %v73
    %v138 = vadd.f32 %v137, %v74
    %v139 = vadd.f32 %v138, %v75
    %v140 = vadd.f32 %v139, %v76
    %v141 = vadd.f32 %v140, %v77
    %v142 = vadd.f32 %v141, %v78
    %v143 = vadd.f32 %v142, %v79
    %v144 = vadd.f32 %v143, %v80
    %v145 = vadd.f32 %v144, %v81
    %v146 = vadd.f32 %v145, %v82
    %v147 = vadd.f32 %v146, %v83
    %v148 = vadd.f32 %v147, %v84
    %v149 = vadd.f32 %v148, %v85
    %v150 = vadd.f32 %v149, %v86
    %v151 = vadd.f32 %v150, %v87
    %v152 = vadd.f32 %v151, %v88
    %v153 = vadd.f32 %v152, %v89
    %v154 = vadd.f32 %v153, %v90
    %v155 = vadd.f32 %v154, %v91
    %v156 = vadd.f32 %v155, %v92
    %v157 = vadd.f32 %v156, %v93
    %v158 = vadd.f32 %v157, %v94
    %v159 = vadd.f32 %v158, %v95
    %v160 = vadd.f32 %v159, %v96
    %v161 = vadd.f32 %v160, %v97
    %v162 = vadd.f32 %v161, %v98
    %v163 = vadd.f32 %v162, %v99
    %v164 = vadd.f32 %v163, %v100
    %v165 = vadd.f32 %v164, %v101
    %v166 = vadd.f32 %v102, %v165
    %167 = vst [vmem:[#allocation2] sm:$0xff] %v166
    %v168 = vld [vmem:[#allocation3] sm:$0xff]
    %v169 = vmul.f32 %v38, %v38
    %v170 = vmul.f32 %v39, %v39
    %v171 = vmul.f32 %v40, %v40
    %v172 = vmul.f32 %v41, %v41
    %v173 = vmul.f32 %v42, %v42
    %v174 = vmul.f32 %v43, %v43
    %v175 = vmul.f32 %v44, %v44
    %v176 = vmul.f32 %v45, %v45
    %v177 = vmul.f32 %v46, %v46
    %v178 = vmul.f32 %v47, %v47
    %v179 = vmul.f32 %v48, %v48
    %v180 = vmul.f32 %v49, %v49
    %v181 = vmul.f32 %v50, %v50
    %v182 = vmul.f32 %v51, %v51
    %v183 = vmul.f32 %v52, %v52
    %v184 = vmul.f32 %v53, %v53
    %v185 = vmul.f32 %v54, %v54
    %v186 = vmul.f32 %v55, %v55
    %v187 = vmul.f32 %v56, %v56
    %v188 = vmul.f32 %v57, %v57
    %v189 = vmul.f32 %v58, %v58
    %v190 = vmul.f32 %v59, %v59
    %v191 = vmul.f32 %v60, %v60
    %v192 = vmul.f32 %v61, %v61
    %v193 = vmul.f32 %v62, %v62
    %v194 = vmul.f32 %v63, %v63
    %v195 = vmul.f32 %v64, %v64
    %v196 = vmul.f32 %v65, %v65
    %v197 = vmul.f32 %v66, %v66
    %v198 = vmul.f32 %v67, %v67
    %v199 = vmul.f32 %v68, %v68
    %v200 = vmul.f32 %v69, %v69
    %v201 = vmul.f32 %v70, %v70
    %v202 = vmul.f32 %v71, %v71
    %v203 = vmul.f32 %v72, %v72
    %v204 = vmul.f32 %v73, %v73
    %v205 = vmul.f32 %v74, %v74
    %v206 = vmul.f32 %v75, %v75
    %v207 = vmul.f32 %v76, %v76
    %v208 = vmul.f32 %v77, %v77
    %v209 = vmul.f32 %v78, %v78
    %v210 = vmul.f32 %v79, %v79
    %v211 = vmul.f32 %v80, %v80
    %v212 = vmul.f32 %v81, %v81
    %v213 = vmul.f32 %v82, %v82
    %v214 = vmul.f32 %v83, %v83
    %v215 = vmul.f32 %v84, %v84
    %v216 = vmul.f32 %v85, %v85
    %v217 = vmul.f32 %v86, %v86
    %v218 = vmul.f32 %v87, %v87
    %v219 = vmul.f32 %v88, %v88
    %v220 = vmul.f32 %v89, %v89
    %v221 = vmul.f32 %v90, %v90
    %v222 = vmul.f32 %v91, %v91
    %v223 = vmul.f32 %v92, %v92
    %v224 = vmul.f32 %v93, %v93
    %v225 = vmul.f32 %v94, %v94
    %v226 = vmul.f32 %v95, %v95
    %v227 = vmul.f32 %v96, %v96
    %v228 = vmul.f32 %v97, %v97
    %v229 = vmul.f32 %v98, %v98
    %v230 = vmul.f32 %v99, %v99
    %v231 = vmul.f32 %v100, %v100
    %v232 = vmul.f32 %v101, %v101
    %v233 = vadd.f32 %v169, %v170
    %v234 = vadd.f32 %v233, %v171
    %v235 = vadd.f32 %v234, %v172
    %v236 = vadd.f32 %v235, %v173
    %v237 = vadd.f32 %v236, %v174
    %v238 = vadd.f32 %v237, %v175
    %v239 = vadd.f32 %v238, %v176
    %v240 = vadd.f32 %v239, %v177
    %v241 = vadd.f32 %v240, %v178
    %v242 = vadd.f32 %v241, %v179
    %v243 = vadd.f32 %v242, %v180
    %v244 = vadd.f32 %v243, %v181
    %v245 = vadd.f32 %v244, %v182
    %v246 = vadd.f32 %v245, %v183
    %v247 = vadd.f32 %v246, %v184
    %v248 = vadd.f32 %v247, %v185
    %v249 = vadd.f32 %v248, %v186
    %v250 = vadd.f32 %v249, %v187
    %v251 = vadd.f32 %v250, %v188
    %v252 = vadd.f32 %v251, %v189
    %v253 = vadd.f32 %v252, %v190
    %v254 = vadd.f32 %v253, %v191
    %v255 = vadd.f32 %v254, %v192
    %v256 = vadd.f32 %v255, %v193
    %v257 = vadd.f32 %v256, %v194
    %v258 = vadd.f32 %v257, %v195
    %v259 = vadd.f32 %v258, %v196
    %v260 = vadd.f32 %v259, %v197
    %v261 = vadd.f32 %v260, %v198
    %v262 = vadd.f32 %v261, %v199
    %v263 = vadd.f32 %v262, %v200
    %v264 = vadd.f32 %v263, %v201
    %v265 = vadd.f32 %v264, %v202
    %v266 = vadd.f32 %v265, %v203
    %v267 = vadd.f32 %v266, %v204
    %v268 = vadd.f32 %v267, %v205
    %v269 = vadd.f32 %v268, %v206
    %v270 = vadd.f32 %v269, %v207
    %v271 = vadd.f32 %v270, %v208
    %v272 = vadd.f32 %v271, %v209
    %v273 = vadd.f32 %v272, %v210
    %v274 = vadd.f32 %v273, %v211
    %v275 = vadd.f32 %v274, %v212
    %v276 = vadd.f32 %v275, %v213
    %v277 = vadd.f32 %v276, %v214
    %v278 = vadd.f32 %v277, %v215
    %v279 = vadd.f32 %v278, %v216
    %v280 = vadd.f32 %v279, %v217
    %v281 = vadd.f32 %v280, %v218
    %v282 = vadd.f32 %v281, %v219
    %v283 = vadd.f32 %v282, %v220
    %v284 = vadd.f32 %v283, %v221
    %v285 = vadd.f32 %v284, %v222
    %v286 = vadd.f32 %v285, %v223
    %v287 = vadd.f32 %v286, %v224
    %v288 = vadd.f32 %v287, %v225
    %v289 = vadd.f32 %v288, %v226
    %v290 = vadd.f32 %v289, %v227
    %v291 = vadd.f32 %v290, %v228
    %v292 = vadd.f32 %v291, %v229
    %v293 = vadd.f32 %v292, %v230
    %v294 = vadd.f32 %v293, %v231
    %v295 = vadd.f32 %v294, %v232
    %v296 = vadd.f32 %v168, %v295
    %297 = vst [vmem:[#allocation3] sm:$0xff] %v296
    // Predicated region
    $region22: #{tpu_custom_call.1} parent=1 // pred_check
      %p298 = pneg %p32
    $region23: #{tpu_custom_call.1} parent=1 // pred_check_branch
      %300 = sbr.rel (%p298) target = $region25
    $region24: #{tpu_custom_call.1} parent=1 // pred_region
      %v301 = vld [vmem:[#allocation2] sm:$0xff]
      %v302 = vrot.slane %v301, 4
      %v303 = vadd.f32 %v301, %v302
      %v304 = vrot.slane %v303, 2
      %v305 = vadd.f32 %v303, %v304
      %v306 = vrot.slane %v305, 1
      %v307 = vadd.f32 %v305, %v306
      %v308 = vmul.f32 %v307, 0.001953125
      %v309 = vld [vmem:[#allocation3] sm:$0xff]
      %v310 = vrot.slane %v309, 4
      %v311 = vadd.f32 %v309, %v310
      %v312 = vrot.slane %v311, 2
      %v313 = vadd.f32 %v311, %v312
      %v314 = vrot.slane %v313, 1
      %v315 = vadd.f32 %v313, %v314
      %v316 = vmul.f32 %v315, 0.001953125
      %v317 = vmul.f32 %v308, %v308
      %v318 = vsub.f32 %v316, %v317
      %v319 = vmax.f32 %v318, 0.0
      %v320 = vld [vmem:[%s1] sm:$0x1]
      %v321 = vadd.f32 %v319, 1e-05
      %v322 = vrsqrt.pop %v321
      %v323 = vmul.f32 %v320, %v322
      %324 = vst [vmem:[#allocation7] sm:$0x1] %v323
      %v325 = vld [vmem:[%s2] sm:$0x1]
      %v326 = vmul.f32 %v308, %v323
      %v327 = vsub.f32 %v325, %v326
      %328 = vst [vmem:[#allocation8] sm:$0x1] %v327
    $region25: #{tpu_custom_call.1} parent=1 // pred_fallthru
      _
    // Predicated region
    $region26: #{tpu_custom_call.1} parent=1 // pred_check
      _
    $region27: #{tpu_custom_call.1} parent=1 // pred_check_branch
      %330 = sbr.rel (0) target = $region29
    $region28: #{tpu_custom_call.1} parent=1 // pred_region
      %s332 = ssub.s32 16, 16
      %333 = vsyncadd [#allocation6], %s332
      %s335 = sshll.u32 [#allocation7], 4
      %s336 = int_to_ptr.vmem [resolvable:$true] %s335
      %338 = dma.vmem_to_hbm [thread:$0]  %s336, 16, %s3, [#allocation6]
    $region29: #{tpu_custom_call.1} parent=1 // pred_fallthru
      _
    // Predicated region
    $region30: #{tpu_custom_call.1} parent=1 // pred_check
      _
    $region31: #{tpu_custom_call.1} parent=1 // pred_check_branch
      %340 = sbr.rel (0) target = $region33
    $region32: #{tpu_custom_call.1} parent=1 // pred_region
      %s342 = ssub.s32 16, 16
      %343 = vsyncadd [#allocation9], %s342
      %s345 = sshll.u32 [#allocation8], 4
      %s346 = int_to_ptr.vmem [resolvable:$true] %s345
      %348 = dma.vmem_to_hbm [thread:$0]  %s346, 16, %s4, [#allocation9]
    $region33: #{tpu_custom_call.1} parent=1 // pred_fallthru
      _
    // Predicated region
    $region34: #{tpu_custom_call.1} parent=1 // pred_check
      _
    $region35: #{tpu_custom_call.1} parent=1 // pred_check_branch
      %350 = sbr.rel (0) target = $region37
    $region36: #{tpu_custom_call.1} parent=1 // pred_region
      %351 = dma.done [#allocation6], 16
    $region37: #{tpu_custom_call.1} parent=1 // pred_fallthru
      _
    // Predicated region
    $region38: #{tpu_custom_call.1} parent=1 // pred_check
      _
    $region39: #{tpu_custom_call.1} parent=1 // pred_check_branch
      %353 = sbr.rel (0) target = $region41
    $region40: #{tpu_custom_call.1} parent=1 // pred_region
      %354 = dma.done [#allocation9], 16
    $region41: #{tpu_custom_call.1} parent=1 // pred_fallthru
      _
    %355 = vsyncpa [#allocation5], 1
    %356 = vsyncpa [#allocation6], 1
    %357 = vsyncpa [#allocation9], 1

</llo_original>
